<compile_context>
chip_gen: v6e
topology: v6e:2x2x1
jax: 0.10.0
libtpu: 0.0.40
codegen_flags: <defaults>
</compile_context>

<pallas_src>
import jax
import jax.numpy as jnp
from jax.experimental import pallas as pl
from jax.experimental.pallas import tpu as pltpu


def _round_up(x, m):
    return ((x + m - 1) // m) * m


def _choose_row_tile(n_rows, p, ep, max_tile=512, vmem_budget=12 * 1024 * 1024):
    """Pick a sublane-aligned row tile TM and the padded row count.

    Minimizes zero-padding (extra HBM traffic on the dominant patch stream),
    breaking ties towards larger tiles (fewer ~0.35us grid steps), subject to
    a conservative per-step double-buffered VMEM budget.
    """
    def fits(tm):
        patches_b = 2 * tm * p * 2     # bf16 patches, double buffered
        w_b = 2 * p * ep * 2           # bf16 weight (resident)
        add_b = 2 * tm * ep * 4        # f32 additive table, double buffered
        out_b = 2 * tm * ep * 4        # f32 output, double buffered
        return patches_b + w_b + add_b + out_b <= vmem_budget

    n8 = _round_up(n_rows, 8)
    if n8 <= max_tile and fits(n8):
        return n8, n8                  # single tile covers all rows

    best_key, best_tm = None, 8
    for tm in range(8, max_tile + 1, 8):
        if not fits(tm):
            break
        pad = _round_up(n_rows, tm) - n_rows
        key = (pad, -tm)               # least padding, then largest tile
        if best_key is None or key < best_key:
            best_key, best_tm = key, tm
    return best_tm, _round_up(n_rows, best_tm)


def patch_embed_kernel(x_ref, w_ref, add_ref, o_ref):
    # x_ref:   (TM, P)  bf16 patch rows (row 0 of the global array is zeros = cls slot)
    # w_ref:   (P, Ep)  bf16 projection weight (transposed vs torch Linear)
    # add_ref: (TM, Ep) f32  per-row additive term (cls+pos[0] / bias+pos[i] / 0 pad)
    # o_ref:   (TM, Ep) output tile
    acc = jnp.dot(x_ref[...], w_ref[...], preferred_element_type=jnp.float32)
    o_ref[...] = (acc + add_ref[...]).astype(o_ref.dtype)


def patch_embedding(x, w_t, bias, cls_token, pos_embed, patch_size,
                    *, out_dtype=jnp.float32):
    """x: (B, C, H, W) float32. Returns (B, N+1, E) in `out_dtype`."""
    B, C, H, W = x.shape
    nh, nw = H // patch_size, W // patch_size
    N = nh * nw
    P = patch_size * patch_size * C
    E = w_t.shape[1]
    N1 = N + 1

    # ---- patchify (layout glue, matches torch view/permute/contiguous/view) ----
    # bf16 *before* the transpose so the materialized copy is half the bytes.
    xb = x.astype(jnp.bfloat16)
    patches = xb.reshape(B, C, nh, patch_size, nw, patch_size)
    patches = patches.transpose(0, 2, 4, 1, 3, 5).reshape(B, N, P)
    # TODO(synk): fuse patchify into the kernel via strided DMA from an
    # ANY-space NCHW ref to remove this materialized HBM copy entirely.

    # ---- TPU-friendly shapes: lane-dense E, sublane-aligned rows, K unpadded ----
    Ep = _round_up(E, 128)
    TM, N1_pad = _choose_row_tile(N1, P, Ep)

    # One leading zero row = cls slot; tail zero rows = sublane/tile padding.
    # (Single pad op; fuses with the transpose copy above.)
    patches_aug = jnp.pad(patches, ((0, 0), (1, N1_pad - N1), (0, 0)))

    w_p = jnp.pad(w_t.astype(jnp.bfloat16), ((0, 0), (0, Ep - E)))      # (P, Ep)

    # Per-row additive table (tiny): row0 = cls + pos[0]; rows 1..N = bias + pos[i];
    # padded rows/cols are exact zeros, so padded outputs are clean zeros.
    pos2d = pos_embed.reshape(N1, E).astype(jnp.float32)
    add = jnp.concatenate(
        [(pos2d[:1] + cls_token.reshape(1, E)),
         (pos2d[1:] + bias.reshape(1, E))], axis=0)                     # (N1, E)
    add = jnp.pad(add, ((0, N1_pad - N1), (0, Ep - E)))                 # (N1_pad, Ep)

    num_row_tiles = N1_pad // TM
    grid = (num_row_tiles, B)   # row-tile outer, batch inner -> w/add stay resident

    out_itemsize = jnp.dtype(out_dtype).itemsize
    cost = pl.CostEstimate(
        flops=2 * B * N1_pad * P * Ep,
        transcendentals=0,
        bytes_accessed=(B * N1_pad * P * 2           # patches (bf16)
                        + P * Ep * 2                 # weight (bf16, resident)
                        + N1_pad * Ep * 4            # additive table, once/row-tile
                        + B * N1_pad * Ep * out_itemsize),
    )

    out_p = pl.pallas_call(
        patch_embed_kernel,
        out_shape=jax.ShapeDtypeStruct((B, N1_pad, Ep), out_dtype),
        grid_spec=pltpu.PrefetchScalarGridSpec(
            num_scalar_prefetch=0,
            grid=grid,
            in_specs=[
                pl.BlockSpec((pl.Squeezed(), TM, P), lambda j, b: (b, j, 0)),
                pl.BlockSpec((P, Ep), lambda j, b: (0, 0)),
                pl.BlockSpec((TM, Ep), lambda j, b: (j, 0)),
            ],
            out_specs=pl.BlockSpec((pl.Squeezed(), TM, Ep), lambda j, b: (b, j, 0)),
        ),
        compiler_params=pltpu.CompilerParams(
            dimension_semantics=("parallel", "parallel")
        ),
        cost_estimate=cost,
    )(patches_aug, w_p, add)

    # Single crop (no concat): row 0 already holds cls + pos[0].
    return out_p[:, :N1, :E]


if __name__ == "__main__":
    # Small shapes consistent with the module.
    B, C, IMG, PATCH, E = 2, 4, 16, 4, 32
    N = (IMG // PATCH) ** 2            # 16 patches
    P = PATCH * PATCH * C              # 64 flattened patch dim

    key = jax.random.PRNGKey(0)
    kx, kw, kb, kc, kp = jax.random.split(key, 5)

    x = jax.random.normal(kx, (B, C, IMG, IMG), dtype=jnp.float32)
    # nn.Linear(P, E): weight (E, P), bias (E). Store transposed weight (P, E).
    w = jax.random.normal(kw, (E, P), dtype=jnp.float32) * 0.02
    w_t = w.T
    bias = jax.random.normal(kb, (E,), dtype=jnp.float32) * 0.02
    cls_token = jax.random.normal(kc, (1, 1, E), dtype=jnp.float32) * 0.02
    pos_embed = jax.random.normal(kp, (1, N + 1, E), dtype=jnp.float32) * 0.02

    out = patch_embedding(x, w_t, bias, cls_token, pos_embed, PATCH)
    out = jax.block_until_ready(out)

    # Reference check in plain JAX (same math as the torch forward, f32).
    patches_ref = x.reshape(B, C, IMG // PATCH, PATCH, IMG // PATCH, PATCH)
    patches_ref = patches_ref.transpose(0, 2, 4, 1, 3, 5).reshape(B, N, P)
    proj_ref = patches_ref @ w_t + bias
    cls_ref = jnp.broadcast_to(cls_token, (B, 1, E))
    ref = jnp.concatenate([cls_ref, proj_ref], axis=1) + pos_embed

    assert out.shape == (B, N + 1, E)
    assert out.dtype == jnp.float32
    # Matmul operands are bf16 (f32 accumulate): compare at bf16-level tolerance.
    assert jnp.allclose(out, ref, atol=2e-2, rtol=2e-2), float(jnp.max(jnp.abs(out - ref)))

    print("KERNEL_OK")
</pallas_src>

<mosaic_0001>
module attributes {stable_mosaic.version = 11 : i64} {
  func.func @patch_embed_kernel(%arg0: i32, %arg1: i32, %arg2: memref<1x24x64xbf16, #tpu.memory_space<vmem>>, %arg3: memref<64x128xbf16, #tpu.memory_space<vmem>>, %arg4: memref<24x128xf32, #tpu.memory_space<vmem>>, %arg5: memref<1x24x128xf32, #tpu.memory_space<vmem>>) attributes {dimension_semantics = [#tpu.dimension_semantics<parallel>, #tpu.dimension_semantics<parallel>], iteration_bounds = array<i64: 1, 2>, scalar_prefetch = 0 : i64, scratch_operands = 0 : i64, tpu.core_type = #tpu.core_type<tc>, window_params = [{transform_indices = @transform_0, window_bounds = array<i64: 1, 24, 64>}, {pipeline_mode = #tpu.pipeline_mode<synchronous>, transform_indices = @transform_1, window_bounds = array<i64: 64, 128>}, {transform_indices = @transform_2, window_bounds = array<i64: 24, 128>}, {transform_indices = @transform_3, window_bounds = array<i64: 1, 24, 128>}]} {
    %c0 = arith.constant 0 : index
    %c0_0 = arith.constant 0 : index
    %c0_1 = arith.constant 0 : index
    %0 = vector.load %arg2[%c0, %c0_0, %c0_1] : memref<1x24x64xbf16, #tpu.memory_space<vmem>>, vector<1x24x64xbf16>
    %1 = vector.shape_cast %0 : vector<1x24x64xbf16> to vector<24x64xbf16>
    %c0_2 = arith.constant 0 : index
    %c0_3 = arith.constant 0 : index
    %2 = vector.load %arg3[%c0_2, %c0_3] : memref<64x128xbf16, #tpu.memory_space<vmem>>, vector<64x128xbf16>
    %cst = arith.constant dense<0.000000e+00> : vector<24x128xf32>
    %3 = tpu.matmul %1, %2, %cst {dimension_numbers = #tpu.dot_dimension_numbers<[1], [0], [0], [1], [0, 0, 1, 1], [], []>} : vector<24x64xbf16>, vector<64x128xbf16>, vector<24x128xf32> -> vector<24x128xf32>
    %c0_4 = arith.constant 0 : index
    %c0_5 = arith.constant 0 : index
    %4 = vector.load %arg4[%c0_4, %c0_5] : memref<24x128xf32, #tpu.memory_space<vmem>>, vector<24x128xf32>
    %5 = arith.addf %3, %4 : vector<24x128xf32>
    %c0_6 = arith.constant 0 : index
    %c0_7 = arith.constant 0 : index
    %c0_8 = arith.constant 0 : index
    %6 = vector.load %arg5[%c0_6, %c0_7, %c0_8] : memref<1x24x128xf32, #tpu.memory_space<vmem>>, vector<1x24x128xf32>
    %7 = vector.shape_cast %6 : vector<1x24x128xf32> to vector<24x128xf32>
    %8 = vector.shape_cast %5 : vector<24x128xf32> to vector<1x24x128xf32>
    tpu.vector_store %arg5[%c0_6, %c0_7, %c0_8], %8 {strides = array<i32>} : memref<1x24x128xf32, #tpu.memory_space<vmem>>, vector<1x24x128xf32>,
    return
  }
  func.func @transform_0(%arg0: i32, %arg1: i32) -> (i32, i32, i32) {
    %c0_i32 = arith.constant 0 : i32
    %c0_i32_0 = arith.constant 0 : i32
    return %arg1, %arg0, %c0_i32 : i32, i32, i32
  }
  func.func @transform_1(%arg0: i32, %arg1: i32) -> (i32, i32) {
    %c0_i32 = arith.constant 0 : i32
    %c0_i32_0 = arith.constant 0 : i32
    %c0_i32_1 = arith.constant 0 : i32
    return %c0_i32, %c0_i32_0 : i32, i32
  }
  func.func @transform_2(%arg0: i32, %arg1: i32) -> (i32, i32) {
    %c0_i32 = arith.constant 0 : i32
    %c0_i32_0 = arith.constant 0 : i32
    return %arg0, %c0_i32 : i32, i32
  }
  func.func @transform_3(%arg0: i32, %arg1: i32) -> (i32, i32, i32) {
    %c0_i32 = arith.constant 0 : i32
    %c0_i32_0 = arith.constant 0 : i32
    return %arg1, %arg0, %c0_i32 : i32, i32, i32
  }
}

</mosaic_0001>

<llo_original>
// kernel: tpu_custom_call.1
$region0: #{tpu_custom_call.1}
  #allocation0 [shape = 'u32[]', space=smem, size = 0x4, offset = 0x4, fixed_abs, tag = 'smem constant byte address 0x4 - core index']
  #allocation1 [shape = 'u32[144,128]{1,0:T(1,128)}', space=vmem, size = 0x12000, scoped, tag = 'internal scratch']
  %s0 = inlined_call_operand.hbm [shape: bf16[2,24,64], index: 0, kind: input, shape index: {}]
  %s1 = inlined_call_operand.hbm [shape: bf16[64,128], index: 1, kind: input, shape index: {}]
  %s2 = inlined_call_operand.hbm [shape: f32[24,128], index: 2, kind: input, shape index: {}]
  %s3 = inlined_call_operand.hbm [shape: f32[2,24,128], index: 3, kind: output, shape index: {}]
  %s4 = sld [smem:[#allocation0]]
  $region57: #{tpu_custom_call.1} parent=0
    _
  %s6 = ssub.s32 1, %s4
  %s7 = scalar_select 0, %s6, %s4
  $region1: #{tpu_custom_call.1} parent=0
    #allocation2 [shape = 'u8[12288]{0}', space=vmem, size = 0x3000, scoped, tag = 'input window, operand 0']
    #allocation3 [shape = 's32[2]{0}', space=sflag, size = 0x8, scoped, tag = 'scoped memory for tpu_custom_call.1']
    #allocation4 [shape = 's32[2]{0}', space=sflag, size = 0x8, scoped, tag = 'scoped memory for tpu_custom_call.1']
    #allocation5 [shape = 'u8[16384]{0}', space=vmem, size = 0x4000, scoped, tag = 'input window, operand 1, single buffered']
    #allocation6 [shape = 's32[1]{0}', space=sflag, size = 0x4, scoped, tag = 'scoped memory for tpu_custom_call.1']
    #allocation7 [shape = 'u8[12288]{0}', space=vmem, size = 0x3000, scoped, tag = 'input window, operand 2, single buffered']
    #allocation8 [shape = 'u8[24576]{0}', space=vmem, size = 0x6000, scoped, tag = 'output window, operand 0']
    %8 = vsyncpa [#allocation3], 0
    %s9 = scalar_lea.sflag [#allocation3], 1
    %10 = vsyncpa %s9, 0
    %11 = vsyncpa [#allocation6], 0
    %12 = vsyncpa [#allocation4], 0
    %s13 = scalar_lea.sflag [#allocation4], 1
    %14 = vsyncpa %s13, 0
    loop: start=0, step=1, limit=4
    $region2: #{tpu_custom_call.1} parent=1 // loop_pre_header
      _
    $region3: #{tpu_custom_call.1} parent=1 // loop_header
      %s16 = sphi 0, %s20
      %p17 = scmp.ge.s32.totalorder %s16, 4
      %s23 = sphi 0, %s35
      %s24 = sphi 0, %s31
      %s25 = sphi 0, %s23
      %s26 = sphi 0, %s24
      %s27 = sphi 0, %s25
      %s28 = sphi 0, %s26
      %s40 = sphi 0, %s42
      %s43 = sphi 0, %s40
      %s44 = sphi 0, %s43
      %s60 = sphi 0, %s44
      %s64 = sphi 0, %s64
      %s66 = sphi 0, %s64
      %s67 = sphi 0, %s66
      %s81 = sphi 0, %s67
      %s87 = sphi 0, %s89
      %s90 = sphi 0, %s87
      %s91 = sphi 0, %s90
      %s107 = sphi 0, %s91
      %s115 = sphi 0, %s117
      %s118 = sphi 0, %s115
      %s119 = sphi 0, %s118
      %s135 = sphi 0, %s119
    $region4: #{tpu_custom_call.1} parent=1 // loop_header_branch
      %19 = sbr.rel (%p17) target = $region8
    $region5: #{tpu_custom_call.1} parent=1 // loop_body
      %s21 = ssub.s32 %s16, 1
      %s22 = ssub.s32 %s16, 2
      %s29 = sadd.s32 1, %s24
      %p30 = scmp.ge.s32.totalorder %s29, 2
      %s31 = scalar_select %p30, 0, %s29
      %s32 = sadd.s32 1, %s23
      %s33 = scalar_select %p30, %s32, %s23
      %p34 = scmp.ge.s32.totalorder %s33, 1
      %s35 = scalar_select %p34, 0, %s33
      %s36 = ssub.s32 %s24, %s31
      %s37 = ssub.s32 %s23, %s35
      %s38 = sor.u32 %s36, %s37
      %p39 = scmp.eq.s32.totalorder %s38, 0
      %s41 = sadd.s32 %s40, 1
      %s42 = scalar_select %p39, %s40, %s41
      %p45 = pneg %p39
      %p46 = scmp.eq.s32.totalorder %s16, 1
      %p47 = por %p45, %p46
      %p48 = scmp.ne.s32.totalorder %s40, %s43
      %p49 = scmp.eq.s32.totalorder %s16, 0
      %p50 = por %p48, %p49
      %p51 = scmp.ne.s32.totalorder %s40, %s43
      %p52 = scmp.eq.s32.totalorder %s21, 1
      %p53 = por %p51, %p52
      %p54 = scmp.ne.s32.totalorder %s43, %s44
      %p55 = scmp.eq.s32.totalorder %s21, 0
      %p56 = por %p54, %p55
      %p57 = scmp.ne.s32.totalorder %s43, %s44
      %p58 = scmp.eq.s32.totalorder %s22, 1
      %p59 = por %p57, %p58
      %p61 = scmp.ne.s32.totalorder %s44, %s60
      %p62 = scmp.eq.s32.totalorder %s22, 0
      %p63 = por %p61, %p62
      %s65 = sadd.s32 %s64, 1
      %p68 = scmp.eq.s32.totalorder %s16, 1
      %p69 = scmp.ne.s32.totalorder %s64, %s66
      %p70 = scmp.eq.s32.totalorder %s16, 0
      %p71 = por %p69, %p70
      %p72 = scmp.ne.s32.totalorder %s64, %s66
      %p73 = scmp.eq.s32.totalorder %s21, 1
      %p74 = por %p72, %p73
      %p75 = scmp.ne.s32.totalorder %s66, %s67
      %p76 = scmp.eq.s32.totalorder %s21, 0
      %p77 = por %p75, %p76
      %p78 = scmp.ne.s32.totalorder %s66, %s67
      %p79 = scmp.eq.s32.totalorder %s22, 1
      %p80 = por %p78, %p79
      %p82 = scmp.ne.s32.totalorder %s67, %s81
      %p83 = scmp.eq.s32.totalorder %s22, 0
      %p84 = por %p82, %p83
      %s85 = ssub.s32 %s23, %s35
      %p86 = scmp.eq.s32.totalorder %s85, 0
      %s88 = sadd.s32 %s87, 1
      %s89 = scalar_select %p86, %s87, %s88
      %p92 = pneg %p86
      %p93 = scmp.eq.s32.totalorder %s16, 1
      %p94 = por %p92, %p93
      %p95 = scmp.ne.s32.totalorder %s87, %s90
      %p96 = scmp.eq.s32.totalorder %s16, 0
      %p97 = por %p95, %p96
      %p98 = scmp.ne.s32.totalorder %s87, %s90
      %p99 = scmp.eq.s32.totalorder %s21, 1
      %p100 = por %p98, %p99
      %p101 = scmp.ne.s32.totalorder %s90, %s91
      %p102 = scmp.eq.s32.totalorder %s21, 0
      %p103 = por %p101, %p102
      %p104 = scmp.ne.s32.totalorder %s90, %s91
      %p105 = scmp.eq.s32.totalorder %s22, 1
      %p106 = por %p104, %p105
      %p108 = scmp.ne.s32.totalorder %s91, %s107
      %p109 = scmp.eq.s32.totalorder %s22, 0
      %p110 = por %p108, %p109
      %s111 = ssub.s32 %s24, %s31
      %s112 = ssub.s32 %s23, %s35
      %s113 = sor.u32 %s111, %s112
      %p114 = scmp.eq.s32.totalorder %s113, 0
      %s116 = sadd.s32 %s115, 1
      %s117 = scalar_select %p114, %s115, %s116
      %p120 = pneg %p114
      %p121 = scmp.eq.s32.totalorder %s16, 1
      %p122 = por %p120, %p121
      %p123 = scmp.ne.s32.totalorder %s115, %s118
      %p124 = scmp.eq.s32.totalorder %s16, 0
      %p125 = por %p123, %p124
      %p126 = scmp.ne.s32.totalorder %s115, %s118
      %p127 = scmp.eq.s32.totalorder %s21, 1
      %p128 = por %p126, %p127
      %p129 = scmp.ne.s32.totalorder %s118, %s119
      %p130 = scmp.eq.s32.totalorder %s21, 0
      %p131 = por %p129, %p130
      %p132 = scmp.ne.s32.totalorder %s118, %s119
      %p133 = scmp.eq.s32.totalorder %s22, 1
      %p134 = por %p132, %p133
      %p136 = scmp.ne.s32.totalorder %s119, %s135
      %p137 = scmp.eq.s32.totalorder %s22, 0
      %p138 = por %p136, %p137
      %p139 = scmp.le.s32.totalorder 1, %s16
      %p140 = scmp.lt.s32.totalorder %s16, 3
      %p141 = pnand %p139, %p140
      %p142 = pneg %p141
      // Predicated region
      $region9: #{tpu_custom_call.1} parent=5 // pred_check
        _
      $region10: #{tpu_custom_call.1} parent=5 // pred_check_branch
        %144 = sbr.rel (%p141) target = $region12
      $region11: #{tpu_custom_call.1} parent=5 // pred_region
        %s145 = ssub.s32 %s16, 1
        // Predicated region
        $region13: #{tpu_custom_call.1} parent=11 // pred_check
          %p146 = pneg %p77
        $region14: #{tpu_custom_call.1} parent=11 // pred_check_branch
          %148 = sbr.rel (%p146) target = $region16
        $region15: #{tpu_custom_call.1} parent=11 // pred_region
          %s150 = ssub.s32 512, 512
          %151 = vsyncadd [#allocation6], %s150
          %s152 = sshll.u32 [#allocation5], 4
          %s153 = int_to_ptr.vmem [resolvable:$true] %s152
          %158 = dma.hbm_to_vmem [thread:$0]  %s1, 512, %s153, [#allocation6], 64, 64, 4
        $region16: #{tpu_custom_call.1} parent=11 // pred_fallthru
          _
        // Predicated region
        $region17: #{tpu_custom_call.1} parent=11 // pred_check
          %p159 = pneg %p103
        $region18: #{tpu_custom_call.1} parent=11 // pred_check_branch
          %161 = sbr.rel (%p159) target = $region20
        $region19: #{tpu_custom_call.1} parent=11 // pred_region
          %s162 = smul.u32 3, %s25
          %s164 = ssub.s32 384, 384
          %165 = vsyncadd [#allocation6], %s164
          %s166 = smul.addr %s162, 128
          %s167 = scalar_lea.hbm %s2, %s166
          %s168 = sshll.u32 [#allocation7], 4
          %s169 = int_to_ptr.vmem [resolvable:$true] %s168
          %174 = dma.hbm_to_vmem [thread:$0]  %s167, 384, %s169, [#allocation6], 128, 128, 8
        $region20: #{tpu_custom_call.1} parent=11 // pred_fallthru
          _
      $region12: #{tpu_custom_call.1} parent=5 // pred_fallthru
        _
      %p175 = scmp.lt.s32.totalorder %s16, 2
      // Predicated region
      $region21: #{tpu_custom_call.1} parent=5 // pred_check
        %p176 = pneg %p175
      $region22: #{tpu_custom_call.1} parent=5 // pred_check_branch
        %178 = sbr.rel (%p176) target = $region24
      $region23: #{tpu_custom_call.1} parent=5 // pred_region
        // Predicated region
        $region25: #{tpu_custom_call.1} parent=23 // pred_check
          %p179 = pneg %p50
        $region26: #{tpu_custom_call.1} parent=23 // pred_check_branch
          %181 = sbr.rel (%p179) target = $region28
        $region27: #{tpu_custom_call.1} parent=23 // pred_region
          %s182 = sand.u32 %s40, 1
          %s183 = scalar_lea.sflag [#allocation3], %s182
          %s184 = sand.u32 %s40, 1
          %s185 = smul.addr %s184, 12
          %s186 = scalar_lea.vmem [#allocation2], %s185
          %s187 = smul.u32 3, %s23
          %s189 = ssub.s32 192, 192
          %190 = vsyncadd %s183, %s189
          %s191 = smul.addr %s24, 3
          %s192 = sadd.s32 %s187, %s191
          %s193 = smul.addr %s192, 64
          %s194 = scalar_lea.hbm %s0, %s193
          %s195 = sshll.u32 %s186, 4
          %s196 = int_to_ptr.vmem [resolvable:$true] %s195
          %201 = dma.hbm_to_vmem [thread:$0]  %s194, 192, %s196, %s183, 64, 64, 4
        $region28: #{tpu_custom_call.1} parent=23 // pred_fallthru
          _
      $region24: #{tpu_custom_call.1} parent=5 // pred_fallthru
        _
      %p202 = scmp.le.s32.totalorder 1, %s16
      %p203 = scmp.lt.s32.totalorder %s16, 3
      %p204 = pnand %p202, %p203
      %p205 = pneg %p204
      // Predicated region
      $region29: #{tpu_custom_call.1} parent=5 // pred_check
        _
      $region30: #{tpu_custom_call.1} parent=5 // pred_check_branch
        %207 = sbr.rel (%p204) target = $region32
      $region31: #{tpu_custom_call.1} parent=5 // pred_region
        %s208 = ssub.s32 %s16, 1
        %s209 = sand.u32 %s43, 1
        %s210 = scalar_lea.sflag [#allocation3], %s209
        %s211 = sand.u32 %s43, 1
        %s212 = smul.addr %s211, 12
        %s213 = scalar_lea.vmem [#allocation2], %s212
        // Predicated region
        $region33: #{tpu_custom_call.1} parent=31 // pred_check
          %p214 = pneg %p56
        $region34: #{tpu_custom_call.1} parent=31 // pred_check_branch
          %216 = sbr.rel (%p214) target = $region36
        $region35: #{tpu_custom_call.1} parent=31 // pred_region
          %217 = dma.done %s210, 192
        $region36: #{tpu_custom_call.1} parent=31 // pred_fallthru
          _
        // Predicated region
        $region37: #{tpu_custom_call.1} parent=31 // pred_check
          %p218 = pneg %p77
        $region38: #{tpu_custom_call.1} parent=31 // pred_check_branch
          %220 = sbr.rel (%p218) target = $region40
        $region39: #{tpu_custom_call.1} parent=31 // pred_region
          %221 = dma.done [#allocation6], 512
        $region40: #{tpu_custom_call.1} parent=31 // pred_fallthru
          _
        // Predicated region
        $region41: #{tpu_custom_call.1} parent=31 // pred_check
          %p222 = pneg %p103
        $region42: #{tpu_custom_call.1} parent=31 // pred_check_branch
          %224 = sbr.rel (%p222) target = $region44
        $region43: #{tpu_custom_call.1} parent=31 // pred_region
          %225 = dma.done [#allocation6], 384
        $region44: #{tpu_custom_call.1} parent=31 // pred_fallthru
          _
        %s226 = sand.u32 %s43, 1
        %s227 = scalar_lea.sflag [#allocation3], %s226
        %s228 = sand.u32 %s43, 1
        %s229 = smul.addr %s228, 12
        %s230 = scalar_lea.vmem [#allocation2], %s229
        %p231 = pneg %p56
        %p232 = pneg %p53
        %p233 = pneg %p77
        %p234 = pneg %p74
        %p235 = pneg %p103
        %p236 = pneg %p100
        %p237 = pneg %p131
        %p238 = pneg %p128
        %s239 = sand.u32 %s118, 1
        %s240 = scalar_lea.sflag [#allocation4], %s239
        %s241 = sand.u32 %s118, 1
        %s242 = smul.addr %s241, 24
        %s243 = scalar_lea.vmem [#allocation8], %s242
        %s244 = smul.u32 3, %s25
        %s245 = smul.u32 3, %s25
        %s246 = smul.u32 3, %s25
        %v248 = vld [vmem:[%s213] sm:$0xf]
        %v249 = vld [vmem:[%s213 + $0x4] sm:$0xf]
        %v250 = vld [vmem:[%s213 + $0x8] sm:$0xf]
        %v251 = vld [vmem:[#allocation5] sm:$0xf]
        %v252 = vld [vmem:[#allocation5 + $0x4] sm:$0xf]
        %v253 = vld [vmem:[#allocation5 + $0x8] sm:$0xf]
        %v254 = vld [vmem:[#allocation5 + $0xc] sm:$0xf]
        %v255 = vld [vmem:[#allocation5 + $0x10] sm:$0xf]
        %v256 = vld [vmem:[#allocation5 + $0x14] sm:$0xf]
        %v257 = vld [vmem:[#allocation5 + $0x18] sm:$0xf]
        %v258 = vld [vmem:[#allocation5 + $0x1c] sm:$0xf]
        %v259 = vld [vmem:[#allocation7] sm:$0xff]
        %v260 = vld [vmem:[#allocation7 + $0x8] sm:$0xff]
        %v261 = vld [vmem:[#allocation7 + $0x10] sm:$0xff]
        %v265 = vunpack.c.l.b16 %v248
        %v266 = vunpack.c.l.b16 %v249
        %v267 = vunpack.c.l.b16 %v250
        %v268 = vpack.c.b16 %v266, %v265
        %v269 = vpack.c.b16 %v267, %v267
        %v278 = vunpack.c.l.b16 %v251
        %v279 = vunpack.c.l.b16 %v252
        %v280 = vunpack.c.l.b16 %v253
        %v281 = vunpack.c.l.b16 %v254
        %v282 = vunpack.c.l.b16 %v255
        %v283 = vunpack.c.l.b16 %v256
        %v284 = vunpack.c.l.b16 %v257
        %v285 = vunpack.c.l.b16 %v258
        %v286 = vpack.c.b16 %v279, %v278
        %v287 = vpack.c.b16 %v281, %v280
        %v288 = vpack.c.b16 %v283, %v282
        %v289 = vpack.c.b16 %v285, %v284
        %vm294 = vcmask 523264
        %v296 = vsel %vm294, %v268, 0
        %v299 = vsel %vm294, %v269, 0
        %301 = vmatprep.subr.bf16.mxu0 0
        %302 = vmatpush1.bf16.msra.mxu0 0
        %303 = vmatprep.subr.bf16.mxu0 0
        %304 = vmatpush1.bf16.msra.mxu0 0
        %305 = vmatprep.subr.bf16.mxu0 0
        %306 = vmatpush1.bf16.msra.mxu0 0
        %307 = vmatprep.subr.bf16.mxu0 0
        %308 = vmatpush1.bf16.msra.mxu0 0
        %309 = vmatprep.subr.bf16.mxu0 0
        %310 = vmatpush1.bf16.msra.mxu0 %v289
        %311 = vmatprep.subr.bf16.mxu0 0
        %312 = vmatpush1.bf16.msra.mxu0 %v288
        %313 = vmatprep.subr.bf16.mxu0 0
        %314 = vmatpush1.bf16.msra.mxu0 %v287
        %315 = vmatprep.subr.bf16.mxu0 0
        %316 = vmatpush1.bf16.msra.mxu0 %v286
        %317 = vmatprep.subr.bf16.mxu0 0
        %318 = vmatpush2.bf16.msra.mxu0 0
        %319 = vmatprep.subr.bf16.mxu0 0
        %320 = vmatpush2.bf16.msra.mxu0 0
        %321 = vmatprep.subr.bf16.mxu0 0
        %322 = vmatpush2.bf16.msra.mxu0 0
        %323 = vmatprep.subr.bf16.mxu0 0
        %324 = vmatpush2.bf16.msra.mxu0 0
        %325 = vmatprep.subr.bf16.mxu0 0
        %326 = vmatpush2.bf16.msra.mxu0 0
        %327 = vmatprep.subr.bf16.mxu0 0
        %328 = vmatpush2.bf16.msra.mxu0 0
        %329 = vmatprep.subr.bf16.mxu0 0
        %330 = vmatpush2.bf16.msra.mxu0 0
        %331 = vmatprep.subr.bf16.mxu0 0
        %332 = vmatpush2.bf16.msra.mxu0 0
        %333 = vmatprep.mubr.bf16.mxu0 0
        %334 = vmatmul.mubr.bf16.gmra.mxu0 %v296
        %v335 = vpop.f32.mrf.mxu0
        %v336 = vadd.f32 %v259, %v335
        %v337 = vpop.f32.mrf.mxu0
        %v338 = vpop.f32.mrf.mxu0
        %v339 = vadd.f32 %v260, %v338
        %v340 = vpop.f32.mrf.mxu0
        %341 = vmatprep.mubr.bf16.mxu0 0
        %342 = vmatmul.mubr.bf16.gmra.mxu0 %v299
        %v343 = vpop.f32.mrf.mxu0
        %v344 = vadd.f32 %v261, %v343
        %v345 = vpop.f32.mrf.mxu0
        %v346 = vpop.f32.mrf.mxu0
        %v347 = vpop.f32.mrf.mxu0
        %348 = vdwg.mxu0
        %349 = vst [vmem:[%s243] sm:$0xff] %v336
        %350 = vst [vmem:[%s243 + $0x8] sm:$0xff] %v339
        %351 = vst [vmem:[%s243 + $0x10] sm:$0xff] %v344
        %s352 = sand.u32 %s118, 1
        %s353 = scalar_lea.sflag [#allocation4], %s352
        %s354 = sand.u32 %s118, 1
        %s355 = smul.addr %s354, 24
        %s356 = scalar_lea.vmem [#allocation8], %s355
        // Predicated region
        $region45: #{tpu_custom_call.1} parent=31 // pred_check
          %p357 = pneg %p128
        $region46: #{tpu_custom_call.1} parent=31 // pred_check_branch
          %359 = sbr.rel (%p357) target = $region48
        $region47: #{tpu_custom_call.1} parent=31 // pred_region
          %s360 = smul.u32 3, %s25
          %s362 = ssub.s32 384, 384
          %363 = vsyncadd %s353, %s362
          %s364 = smul.addr %s26, 3
          %s365 = sadd.s32 %s360, %s364
          %s366 = smul.addr %s365, 128
          %s367 = scalar_lea.hbm %s3, %s366
          %s368 = sshll.u32 %s356, 4
          %s369 = int_to_ptr.vmem [resolvable:$true] %s368
          %374 = dma.vmem_to_hbm [thread:$0]  %s369, 384, %s367, %s353, 128, 128, 8
        $region48: #{tpu_custom_call.1} parent=31 // pred_fallthru
          _
      $region32: #{tpu_custom_call.1} parent=5 // pred_fallthru
        _
      %p375 = scmp.le.s32.totalorder 2, %s16
      // Predicated region
      $region49: #{tpu_custom_call.1} parent=5 // pred_check
        %p376 = pneg %p375
      $region50: #{tpu_custom_call.1} parent=5 // pred_check_branch
        %378 = sbr.rel (%p376) target = $region52
      $region51: #{tpu_custom_call.1} parent=5 // pred_region
        %s379 = ssub.s32 %s16, 2
        // Predicated region
        $region53: #{tpu_custom_call.1} parent=51 // pred_check
          %p380 = pneg %p134
        $region54: #{tpu_custom_call.1} parent=51 // pred_check_branch
          %382 = sbr.rel (%p380) target = $region56
        $region55: #{tpu_custom_call.1} parent=51 // pred_region
          %s383 = sand.u32 %s119, 1
          %s384 = scalar_lea.sflag [#allocation4], %s383
          %s385 = sand.u32 %s119, 1
          %s386 = smul.addr %s385, 24
          %s387 = scalar_lea.vmem [#allocation8], %s386
          %388 = dma.done %s384, 384
        $region56: #{tpu_custom_call.1} parent=51 // pred_fallthru
          _
      $region52: #{tpu_custom_call.1} parent=5 // pred_fallthru
        _
    $region6: #{tpu_custom_call.1} parent=1 // loop_footer
      %s20 = sadd.s32 1, %s16
    $region7: #{tpu_custom_call.1} parent=1 // loop_footer_branch
      %15 = sbr.rel target = $region3
    $region8: #{tpu_custom_call.1} parent=1 // loop_exit
      _
    %389 = vsyncpa [#allocation3], 1
    %s390 = scalar_lea.sflag [#allocation3], 1
    %391 = vsyncpa %s390, 1
    %392 = vsyncpa [#allocation6], 1
    %393 = vsyncpa [#allocation4], 1
    %s394 = scalar_lea.sflag [#allocation4], 1
    %395 = vsyncpa %s394, 1

</llo_original>
